<compile_context>
chip_gen: v6e
topology: v6e:2x2x1
jax: 0.10.0
libtpu: 0.0.40
codegen_flags: <defaults>
</compile_context>

<pallas_src>
import functools

import numpy as np

import jax
import jax.numpy as jnp
from jax import lax
from jax.experimental import pallas as pl
from jax.experimental.pallas import tpu as pltpu


def _round_up(x, m):
    return ((x + m - 1) // m) * m


def _mmd_kernel(ii_ref, jj_ref, zi_ref, zj_ref, out_ref, acc_ref, *,
                batch, tile_b, inv_two_sigma_sq, denom_inv):
    t = pl.program_id(0)
    ii = ii_ref[t]                      # block-row index (scalar, SMEM)
    jj = jj_ref[t]                      # block-col index (scalar, SMEM)

    @pl.when(t == 0)
    def _():
        acc_ref[...] = jnp.zeros_like(acc_ref)

    zi = zi_ref[...].astype(jnp.float32)          # (TB, D)
    zj = zj_ref[...].astype(jnp.float32)          # (TB, D)

    # Pairwise squared distances via the norm trick; Gram tile on the MXU.
    gram = lax.dot_general(zi, zj, (((1,), (1,)), ((), ())),
                           preferred_element_type=jnp.float32)       # (TB, TB)
    ni = jnp.sum(zi * zi, axis=1, keepdims=True)                     # (TB, 1)
    ones_row = jnp.ones((1, zj.shape[1]), jnp.float32)
    nj = lax.dot_general(ones_row, zj * zj, (((1,), (1,)), ((), ())),
                         preferred_element_type=jnp.float32)         # (1, TB)

    sqdist = jnp.maximum(ni + nj - 2.0 * gram, 0.0)
    kern = jnp.exp(-jnp.sqrt(sqdist) * inv_two_sigma_sq)

    # Mask padded rows/cols and the diagonal (== subtracting K.diag().sum()).
    row = ii * tile_b + lax.broadcasted_iota(jnp.int32, kern.shape, 0)
    col = jj * tile_b + lax.broadcasted_iota(jnp.int32, kern.shape, 1)
    valid = (row < batch) & (col < batch) & (row != col)

    # Only the upper triangle of block pairs is visited; K is symmetric, so
    # each off-diagonal tile stands in for its mirror image as well.
    weight = jnp.where(ii == jj, 1.0, 2.0).astype(jnp.float32)
    acc_ref[...] += jnp.where(valid, kern, 0.0) * weight

    @pl.when(t == pl.num_programs(0) - 1)
    def _():
        out_ref[...] = (jnp.sum(acc_ref[...]) * denom_inv).reshape(1, 1)


def mmd_loss(z, sigma=1.0, *, max_tile=256):
    """Equivalent of MMD_loss(sigma)(z) for z of shape (batch, features)."""
    z = jnp.asarray(z)
    assert z.ndim == 2, "MMD_loss expects a (batch, features) input"
    b, d = z.shape

    # Tile the batch dimension; pad with zeros (masked in-kernel) so the tile
    # size is chosen for performance, not by the caller's shape.
    tile_b = max_tile if b > max_tile else _round_up(b, 8)
    b_pad = _round_up(b, tile_b)
    if b_pad != b:
        z = jnp.zeros((b_pad, d), z.dtype).at[:b, :].set(z)
    n_blk = b_pad // tile_b

    # Upper-triangular (block_i <= block_j) list of tile pairs; the kernel
    # doubles off-diagonal contributions, so the lower triangle is skipped.
    tri_i, tri_j = np.triu_indices(n_blk)
    tri_i = jnp.asarray(tri_i, jnp.int32)
    tri_j = jnp.asarray(tri_j, jnp.int32)
    n_steps = int(tri_i.shape[0])

    kernel = functools.partial(
        _mmd_kernel,
        batch=b,
        tile_b=tile_b,
        inv_two_sigma_sq=float(1.0 / (2.0 * sigma ** 2)),
        denom_inv=float(1.0 / (b * (b - 1))),
    )

    out = pl.pallas_call(
        kernel,
        out_shape=jax.ShapeDtypeStruct((1, 1), jnp.float32),
        grid_spec=pltpu.PrefetchScalarGridSpec(
            num_scalar_prefetch=2,
            grid=(n_steps,),
            in_specs=[
                pl.BlockSpec((tile_b, d), lambda t, ii, jj: (ii[t], 0)),
                pl.BlockSpec((tile_b, d), lambda t, ii, jj: (jj[t], 0)),
            ],
            out_specs=pl.BlockSpec((1, 1), lambda t, ii, jj: (0, 0)),
            scratch_shapes=[pltpu.VMEM((tile_b, tile_b), jnp.float32)],
        ),
        compiler_params=pltpu.CompilerParams(
            # Single resident accumulator/output => the grid axis is a
            # reduction.
            dimension_semantics=("arbitrary",),
            vmem_limit_bytes=64 * 1024 * 1024,
        ),
    )(tri_i, tri_j, z, z)

    return out[0, 0]


def _reference(z, sigma=1.0):
    z = z.astype(jnp.float32)
    b = z.shape[0]
    diff = z[:, None, :] - z[None, :, :]
    dist = jnp.sqrt(jnp.sum(diff * diff, axis=-1))
    k = jnp.exp(-dist / (2.0 * sigma ** 2))
    return (jnp.sum(k) - jnp.sum(jnp.diagonal(k))) / (b * (b - 1))


if __name__ == "__main__":
    key = jax.random.PRNGKey(0)
    k1, k2 = jax.random.split(key)

    sigma = 1.0

    # Primary small example: batch=8, hidden=32 (what forward(z) implies).
    z = jax.random.normal(k1, (8, 32), dtype=jnp.float32)
    loss = mmd_loss(z, sigma)
    jax.block_until_ready(loss)
    ref = _reference(z, sigma)
    assert jnp.allclose(loss, ref, rtol=1e-2, atol=1e-6), (loss, ref)

    # Secondary check: exercises batch padding (40 -> 48), the triangular
    # multi-tile path (grid length 6), and the off-diagonal x2 weighting.
    z2 = jax.random.normal(k2, (40, 64), dtype=jnp.float32)
    loss2 = mmd_loss(z2, sigma, max_tile=16)
    jax.block_until_ready(loss2)
    ref2 = _reference(z2, sigma)
    assert jnp.allclose(loss2, ref2, rtol=1e-2, atol=1e-6), (loss2, ref2)

    print("KERNEL_OK")
</pallas_src>

<mosaic_0001>
module attributes {stable_mosaic.version = 11 : i64} {
  func.func @_mmd_kernel(%arg0: i32, %arg1: memref<1xi32, #tpu.memory_space<smem>>, %arg2: memref<1xi32, #tpu.memory_space<smem>>, %arg3: memref<8x32xf32, #tpu.memory_space<vmem>>, %arg4: memref<8x32xf32, #tpu.memory_space<vmem>>, %arg5: memref<1x1xf32, #tpu.memory_space<vmem>>, %arg6: memref<8x8xf32, #tpu.memory_space<vmem>>) attributes {dimension_semantics = [#tpu.dimension_semantics<arbitrary>], iteration_bounds = array<i64: 1>, scalar_prefetch = 2 : i64, scratch_operands = 1 : i64, tpu.core_type = #tpu.core_type<tc>, window_params = [{transform_indices = @transform_0, window_bounds = array<i64: 8, 32>}, {transform_indices = @transform_1, window_bounds = array<i64: 8, 32>}, {pipeline_mode = #tpu.pipeline_mode<synchronous>, transform_indices = @transform_2, window_bounds = array<i64: 1, 1>}]} {
    %0 = arith.index_cast %arg0 : i32 to index
    %1 = memref.load %arg1[%0] : memref<1xi32, #tpu.memory_space<smem>>
    %2 = arith.index_cast %arg0 : i32 to index
    %3 = memref.load %arg2[%2] : memref<1xi32, #tpu.memory_space<smem>>
    %c0_i32 = arith.constant 0 : i32
    %4 = arith.cmpi eq, %arg0, %c0_i32 : i32
    %5 = arith.extui %4 : i1 to i32
    %c0_i32_0 = arith.constant 0 : i32
    %6 = arith.cmpi ne, %5, %c0_i32_0 : i32
    scf.if %6 {
      %cst_23 = arith.constant 0.000000e+00 : f32
      %57 = vector.broadcast %cst_23 : f32 to vector<8x8xf32>
      %c0_24 = arith.constant 0 : index
      %c0_25 = arith.constant 0 : index
      %58 = vector.load %arg6[%c0_24, %c0_25] : memref<8x8xf32, #tpu.memory_space<vmem>>, vector<8x8xf32>
      tpu.vector_store %arg6[%c0_24, %c0_25], %57 {strides = array<i32>} : memref<8x8xf32, #tpu.memory_space<vmem>>, vector<8x8xf32>,
    } else {
    }
    %c0 = arith.constant 0 : index
    %c0_1 = arith.constant 0 : index
    %7 = vector.load %arg3[%c0, %c0_1] : memref<8x32xf32, #tpu.memory_space<vmem>>, vector<8x32xf32>
    %c0_2 = arith.constant 0 : index
    %c0_3 = arith.constant 0 : index
    %8 = vector.load %arg4[%c0_2, %c0_3] : memref<8x32xf32, #tpu.memory_space<vmem>>, vector<8x32xf32>
    %cst = arith.constant dense<0.000000e+00> : vector<8x8xf32>
    %9 = tpu.matmul %7, %8, %cst {dimension_numbers = #tpu.dot_dimension_numbers<[1], [1], [0], [0], [0, 0, 1, 0], [], []>} : vector<8x32xf32>, vector<8x32xf32>, vector<8x8xf32> -> vector<8x8xf32>
    %10 = arith.mulf %7, %7 : vector<8x32xf32>
    %cst_4 = arith.constant dense<0.000000e+00> : vector<8xf32>
    %11 = vector.multi_reduction <add>, %10, %cst_4 [1] : vector<8x32xf32> to vector<8xf32>
    %12 = vector.shape_cast %11 : vector<8xf32> to vector<8x1xf32>
    %cst_5 = arith.constant 1.000000e+00 : f32
    %13 = vector.broadcast %cst_5 : f32 to vector<1x32xf32>
    %14 = arith.mulf %8, %8 : vector<8x32xf32>
    %cst_6 = arith.constant dense<0.000000e+00> : vector<1x8xf32>
    %15 = tpu.matmul %13, %14, %cst_6 {dimension_numbers = #tpu.dot_dimension_numbers<[1], [1], [0], [0], [0, 0, 1, 0], [], []>} : vector<1x32xf32>, vector<8x32xf32>, vector<1x8xf32> -> vector<1x8xf32>
    %16 = vector.broadcast %12 : vector<8x1xf32> to vector<8x8xf32>
    %17 = vector.broadcast %15 : vector<1x8xf32> to vector<8x8xf32>
    %18 = arith.addf %16, %17 : vector<8x8xf32>
    %cst_7 = arith.constant 2.000000e+00 : f32
    %19 = vector.broadcast %cst_7 : f32 to vector<8x8xf32>
    %20 = arith.mulf %19, %9 : vector<8x8xf32>
    %21 = arith.subf %18, %20 : vector<8x8xf32>
    %cst_8 = arith.constant 0.000000e+00 : f32
    %22 = vector.broadcast %cst_8 : f32 to vector<8x8xf32>
    %23 = arith.maximumf %21, %22 : vector<8x8xf32>
    %24 = math.sqrt %23 : vector<8x8xf32>
    %cst_9 = arith.constant 0.000000e+00 : f32
    %25 = vector.broadcast %cst_9 : f32 to vector<8x8xf32>
    %26 = arith.subf %25, %24 : vector<8x8xf32>
    %cst_10 = arith.constant 5.000000e-01 : f32
    %27 = vector.broadcast %cst_10 : f32 to vector<8x8xf32>
    %28 = arith.mulf %26, %27 : vector<8x8xf32>
    %29 = math.exp %28 : vector<8x8xf32>
    %c8_i32 = arith.constant 8 : i32
    %30 = arith.muli %1, %c8_i32 : i32
    %31 = tpu.iota {dimensions = array<i32: 0>} : vector<8x8xi32>
    %32 = vector.broadcast %30 : i32 to vector<8x8xi32>
    %33 = arith.addi %32, %31 : vector<8x8xi32>
    %c8_i32_11 = arith.constant 8 : i32
    %34 = arith.muli %3, %c8_i32_11 : i32
    %35 = tpu.iota {dimensions = array<i32: 1>} : vector<8x8xi32>
    %36 = vector.broadcast %34 : i32 to vector<8x8xi32>
    %37 = arith.addi %36, %35 : vector<8x8xi32>
    %c8_i32_12 = arith.constant 8 : i32
    %38 = vector.broadcast %c8_i32_12 : i32 to vector<8x8xi32>
    %39 = arith.cmpi slt, %33, %38 : vector<8x8xi32>
    %c8_i32_13 = arith.constant 8 : i32
    %40 = vector.broadcast %c8_i32_13 : i32 to vector<8x8xi32>
    %41 = arith.cmpi slt, %37, %40 : vector<8x8xi32>
    %42 = arith.andi %39, %41 : vector<8x8xi1>
    %43 = arith.cmpi ne, %33, %37 : vector<8x8xi32>
    %44 = arith.andi %42, %43 : vector<8x8xi1>
    %45 = arith.cmpi eq, %1, %3 : i32
    %cst_14 = arith.constant 1.000000e+00 : f32
    %cst_15 = arith.constant 2.000000e+00 : f32
    %46 = arith.select %45, %cst_14, %cst_15 : f32
    %c0_16 = arith.constant 0 : index
    %c0_17 = arith.constant 0 : index
    %47 = vector.load %arg6[%c0_16, %c0_17] : memref<8x8xf32, #tpu.memory_space<vmem>>, vector<8x8xf32>
    %cst_18 = arith.constant 0.000000e+00 : f32
    %48 = vector.broadcast %cst_18 : f32 to vector<8x8xf32>
    %49 = arith.select %44, %29, %48 : vector<8x8xi1>, vector<8x8xf32>
    %50 = vector.broadcast %46 : f32 to vector<8x8xf32>
    %51 = arith.mulf %49, %50 : vector<8x8xf32>
    %52 = arith.addf %47, %51 : vector<8x8xf32>
    %c0_19 = arith.constant 0 : index
    %c0_20 = arith.constant 0 : index
    %53 = vector.load %arg6[%c0_19, %c0_20] : memref<8x8xf32, #tpu.memory_space<vmem>>, vector<8x8xf32>
    tpu.vector_store %arg6[%c0_19, %c0_20], %52 {strides = array<i32>} : memref<8x8xf32, #tpu.memory_space<vmem>>, vector<8x8xf32>,
    %c0_i32_21 = arith.constant 0 : i32
    %54 = arith.cmpi eq, %arg0, %c0_i32_21 : i32
    %55 = arith.extui %54 : i1 to i32
    %c0_i32_22 = arith.constant 0 : i32
    %56 = arith.cmpi ne, %55, %c0_i32_22 : i32
    scf.if %56 {
      %c0_23 = arith.constant 0 : index
      %c0_24 = arith.constant 0 : index
      %57 = vector.load %arg6[%c0_23, %c0_24] : memref<8x8xf32, #tpu.memory_space<vmem>>, vector<8x8xf32>
      %58 = vector.shape_cast %57 : vector<8x8xf32> to vector<1x8x8xf32>
      %cst_25 = arith.constant dense<0.000000e+00> : vector<1xf32>
      %59 = vector.multi_reduction <add>, %58, %cst_25 [1, 2] : vector<1x8x8xf32> to vector<1xf32>
      %60 = vector.shape_cast %59 : vector<1xf32> to vector<1x1x1xf32>
      %61 = vector.extract %60[0, 0, 0] : f32 from vector<1x1x1xf32>
      %cst_26 = arith.constant 0.0178571437 : f32
      %62 = arith.mulf %61, %cst_26 : f32
      %63 = vector.broadcast %62 : f32 to vector<1x1xf32>
      %c0_27 = arith.constant 0 : index
      %c0_28 = arith.constant 0 : index
      %64 = vector.load %arg5[%c0_27, %c0_28] : memref<1x1xf32, #tpu.memory_space<vmem>>, vector<1x1xf32>
      tpu.vector_store %arg5[%c0_27, %c0_28], %63 {strides = array<i32>} : memref<1x1xf32, #tpu.memory_space<vmem>>, vector<1x1xf32>,
    } else {
    }
    return
  }
  func.func @transform_0(%arg0: i32, %arg1: memref<1xi32, #tpu.memory_space<smem>>, %arg2: memref<1xi32, #tpu.memory_space<smem>>) -> (i32, i32) {
    %0 = arith.index_cast %arg0 : i32 to index
    %1 = memref.load %arg1[%0] : memref<1xi32, #tpu.memory_space<smem>>
    %c0_i32 = arith.constant 0 : i32
    %c0_i32_0 = arith.constant 0 : i32
    return %1, %c0_i32 : i32, i32
  }
  func.func @transform_1(%arg0: i32, %arg1: memref<1xi32, #tpu.memory_space<smem>>, %arg2: memref<1xi32, #tpu.memory_space<smem>>) -> (i32, i32) {
    %0 = arith.index_cast %arg0 : i32 to index
    %1 = memref.load %arg2[%0] : memref<1xi32, #tpu.memory_space<smem>>
    %c0_i32 = arith.constant 0 : i32
    %c0_i32_0 = arith.constant 0 : i32
    return %1, %c0_i32 : i32, i32
  }
  func.func @transform_2(%arg0: i32, %arg1: memref<1xi32, #tpu.memory_space<smem>>, %arg2: memref<1xi32, #tpu.memory_space<smem>>) -> (i32, i32) {
    %c0_i32 = arith.constant 0 : i32
    %c0_i32_0 = arith.constant 0 : i32
    %c0_i32_1 = arith.constant 0 : i32
    return %c0_i32, %c0_i32_0 : i32, i32
  }
}

</mosaic_0001>

<llo_original>
// kernel: tpu_custom_call.1
$region0: #{tpu_custom_call.1}
  #allocation0 [shape = 'u32[]', space=smem, size = 0x4, offset = 0x4, fixed_abs, tag = 'smem constant byte address 0x4 - core index']
  #allocation1 [shape = 'u32[144,128]{1,0:T(1,128)}', space=vmem, size = 0x12000, scoped, tag = 'internal scratch']
  #allocation2 [shape = 'f32[8,8]{1,0:T(8,128)}', space=vmem, size = 0x1000, scoped, tag = 'scratch operand']
  #allocation3 [shape = 's32[1]{0}', space=sflag, size = 0x4, scoped, tag = 'scoped memory for tpu_custom_call.1']
  #allocation4 [shape = 's32[1]{0:T(128)S(6)}', space=smem, size = 0x200, scoped, tag = 'prefetched SMEM operand 0']
  #allocation5 [shape = 's32[1]{0:T(128)S(6)}', space=smem, size = 0x200, scoped, tag = 'prefetched SMEM operand 1']
  %s0 = inlined_call_operand.<no memory space> [shape: s32[1], index: 0, kind: input, shape index: {}]
  %s1 = inlined_call_operand.<no memory space> [shape: s32[1], index: 1, kind: input, shape index: {}]
  %s2 = inlined_call_operand.hbm [shape: f32[8,32], index: 2, kind: input, shape index: {}]
  %s3 = inlined_call_operand.hbm [shape: f32[8,32], index: 3, kind: input, shape index: {}]
  %s4 = inlined_call_operand.hbm [shape: f32[1,1], index: 4, kind: output, shape index: {}]
  %s5 = sld [smem:[#allocation0]]
  $region34: #{tpu_custom_call.1} parent=0
    _
  %s7 = ssub.s32 1, %s5
  %s8 = scalar_select 0, %s7, %s5
  %9 = sst [smem:[#allocation4]] %s0
  %10 = sst [smem:[#allocation5]] %s1
  $region1: #{tpu_custom_call.1} parent=0
    #allocation6 [shape = 'u8[4096]{0}', space=vmem, size = 0x1000, scoped, tag = 'input window, operand 2, single buffered']
    #allocation7 [shape = 's32[1]{0}', space=sflag, size = 0x4, scoped, tag = 'scoped memory for tpu_custom_call.1']
    #allocation8 [shape = 's32[1]{0}', space=sflag, size = 0x4, scoped, tag = 'scoped memory for tpu_custom_call.1']
    #allocation9 [shape = 'u8[4096]{0}', space=vmem, size = 0x1000, scoped, tag = 'input window, operand 3, single buffered']
    #allocation10 [shape = 's32[1]{0}', space=sflag, size = 0x4, scoped, tag = 'scoped memory for tpu_custom_call.1']
    #allocation11 [shape = 'u8[512]{0}', space=vmem, size = 0x400, scoped, tag = 'output window, operand 0, single buffered']
    %11 = vsyncpa [#allocation7], 0
    %12 = vsyncpa [#allocation10], 0
    %13 = vsyncpa [#allocation8], 0
    // Predicated region
    $region2: #{tpu_custom_call.1} parent=1 // pred_check
      _
    $region3: #{tpu_custom_call.1} parent=1 // pred_check_branch
      %15 = sbr.rel (0) target = $region5
    $region4: #{tpu_custom_call.1} parent=1 // pred_region
      %s16 = sld [smem:[#allocation4]]
      %s18 = ssub.s32 128, 128
      %19 = vsyncadd [#allocation7], %s18
      %s20 = smul.addr %s16, 128
      %s21 = scalar_lea.hbm %s2, %s20
      %s23 = sshll.u32 [#allocation6], 4
      %s24 = int_to_ptr.vmem [resolvable:$true] %s23
      %26 = dma.hbm_to_vmem [thread:$0]  %s21, 128, %s24, [#allocation7]
    $region5: #{tpu_custom_call.1} parent=1 // pred_fallthru
      _
    // Predicated region
    $region6: #{tpu_custom_call.1} parent=1 // pred_check
      _
    $region7: #{tpu_custom_call.1} parent=1 // pred_check_branch
      %28 = sbr.rel (0) target = $region9
    $region8: #{tpu_custom_call.1} parent=1 // pred_region
      %s29 = sld [smem:[#allocation5]]
      %s31 = ssub.s32 128, 128
      %32 = vsyncadd [#allocation10], %s31
      %s33 = smul.addr %s29, 128
      %s34 = scalar_lea.hbm %s3, %s33
      %s36 = sshll.u32 [#allocation9], 4
      %s37 = int_to_ptr.vmem [resolvable:$true] %s36
      %39 = dma.hbm_to_vmem [thread:$0]  %s34, 128, %s37, [#allocation10]
    $region9: #{tpu_custom_call.1} parent=1 // pred_fallthru
      _
    // Predicated region
    $region10: #{tpu_custom_call.1} parent=1 // pred_check
      _
    $region11: #{tpu_custom_call.1} parent=1 // pred_check_branch
      %41 = sbr.rel (0) target = $region13
    $region12: #{tpu_custom_call.1} parent=1 // pred_region
      %42 = dma.done [#allocation7], 128
    $region13: #{tpu_custom_call.1} parent=1 // pred_fallthru
      _
    // Predicated region
    $region14: #{tpu_custom_call.1} parent=1 // pred_check
      _
    $region15: #{tpu_custom_call.1} parent=1 // pred_check_branch
      %44 = sbr.rel (0) target = $region17
    $region16: #{tpu_custom_call.1} parent=1 // pred_region
      %45 = dma.done [#allocation10], 128
    $region17: #{tpu_custom_call.1} parent=1 // pred_fallthru
      _
    %s46 = sld [smem:[#allocation4]]
    %s47 = sld [smem:[#allocation5]]
    %s48 = sld [smem:[#allocation4]]
    %s49 = sld [smem:[#allocation5]]
    %p50 = scmp.eq.s32.totalorder 0, 0
    // Predicated region
    $region18: #{tpu_custom_call.1} parent=1 // pred_check
      %p51 = pneg %p50
    $region19: #{tpu_custom_call.1} parent=1 // pred_check_branch
      %53 = sbr.rel (%p51) target = $region21
    $region20: #{tpu_custom_call.1} parent=1 // pred_region
      %vm54 = vcmask 64512
      %55 = vst.msk [vmem:[#allocation2] sm:$0xff] %vm54, 0.0
    $region21: #{tpu_custom_call.1} parent=1 // pred_fallthru
      _
    %v56 = vld [vmem:[#allocation6] sm:$0xff]
    %v57 = vld [vmem:[#allocation9] sm:$0xff]
    %vm58 = vcmask 261120
    %v60 = vsel %vm58, %v56, 0
    %v63 = vsel %vm58, %v57, 0
    %65 = vmatprep.subr.mxu0 0.0
    %66 = vmatpush1.xpose.msra.mxu0 0.0
    %67 = vmatprep.subr.mxu0 0.0
    %68 = vmatpush1.xpose.msra.mxu0 0.0
    %69 = vmatprep.subr.mxu0 0.0
    %70 = vmatpush1.xpose.msra.mxu0 0.0
    %71 = vmatprep.subr.mxu0 0.0
    %72 = vmatpush1.xpose.msra.mxu0 0.0
    %73 = vmatprep.subr.mxu0 0.0
    %74 = vmatpush1.xpose.msra.mxu0 0.0
    %75 = vmatprep.subr.mxu0 0.0
    %76 = vmatpush1.xpose.msra.mxu0 0.0
    %77 = vmatprep.subr.mxu0 0.0
    %78 = vmatpush1.xpose.msra.mxu0 0.0
    %79 = vmatprep.subr.mxu0 0.0
    %80 = vmatpush1.xpose.msra.mxu0 0.0
    %81 = vmatprep.subr.mxu0 0.0
    %82 = vmatpush1.xpose.msra.mxu0 0.0
    %83 = vmatprep.subr.mxu0 0.0
    %84 = vmatpush1.xpose.msra.mxu0 0.0
    %85 = vmatprep.subr.mxu0 0.0
    %86 = vmatpush1.xpose.msra.mxu0 0.0
    %87 = vmatprep.subr.mxu0 0.0
    %88 = vmatpush1.xpose.msra.mxu0 0.0
    %89 = vmatprep.subr.mxu0 0.0
    %90 = vmatpush1.xpose.msra.mxu0 0.0
    %91 = vmatprep.subr.mxu0 0.0
    %92 = vmatpush1.xpose.msra.mxu0 0.0
    %93 = vmatprep.subr.mxu0 0.0
    %94 = vmatpush1.xpose.msra.mxu0 0.0
    %95 = vmatprep.subr.mxu0 0.0
    %96 = vmatpush1.xpose.msra.mxu0 %v63
    %97 = vmatprep.subr.mxu0 0.0
    %98 = vmatpush2.xpose.msra.mxu0 0.0
    %99 = vmatprep.subr.mxu0 0.0
    %100 = vmatpush2.xpose.msra.mxu0 0.0
    %101 = vmatprep.subr.mxu0 0.0
    %102 = vmatpush2.xpose.msra.mxu0 0.0
    %103 = vmatprep.subr.mxu0 0.0
    %104 = vmatpush2.xpose.msra.mxu0 0.0
    %105 = vmatprep.subr.mxu0 0.0
    %106 = vmatpush2.xpose.msra.mxu0 0.0
    %107 = vmatprep.subr.mxu0 0.0
    %108 = vmatpush2.xpose.msra.mxu0 0.0
    %109 = vmatprep.subr.mxu0 0.0
    %110 = vmatpush2.xpose.msra.mxu0 0.0
    %111 = vmatprep.subr.mxu0 0.0
    %112 = vmatpush2.xpose.msra.mxu0 0.0
    %113 = vmatprep.subr.mxu0 0.0
    %114 = vmatpush2.xpose.msra.mxu0 0.0
    %115 = vmatprep.subr.mxu0 0.0
    %116 = vmatpush2.xpose.msra.mxu0 0.0
    %117 = vmatprep.subr.mxu0 0.0
    %118 = vmatpush2.xpose.msra.mxu0 0.0
    %119 = vmatprep.subr.mxu0 0.0
    %120 = vmatpush2.xpose.msra.mxu0 0.0
    %121 = vmatprep.subr.mxu0 0.0
    %122 = vmatpush2.xpose.msra.mxu0 0.0
    %123 = vmatprep.subr.mxu0 0.0
    %124 = vmatpush2.xpose.msra.mxu0 0.0
    %125 = vmatprep.subr.mxu0 0.0
    %126 = vmatpush2.xpose.msra.mxu0 0.0
    %127 = vmatprep.subr.mxu0 0.0
    %128 = vmatpush2.xpose.msra.mxu0 0.0
    %129 = vmatprep.mubr.f32.mxu0 0.0
    %130 = vmatmul.mubr.f32.gmra.mxu0 %v60
    %v131 = vpop.f32.mrf.mxu0
    %v132 = vadd.f32 0.0, %v131
    %v133 = vpop.f32.mrf.mxu0
    %134 = vdwg.mxu0
    %v135 = vmul.f32 %v56, %v56
    %v136 = vsel %vm58, %v135, 0.0
    %137 = vadd.xlane.f32.xlu0 %v136
    %v138 = vpop.xlane.xlu0 %137
    %v139 = vmul.f32 %v57, %v57
    %v141 = vsel %vm58, 1.0, 0
    %v144 = vsel %vm58, %v139, 0
    %146 = vmatprep.subr.mxu0 0.0
    %147 = vmatpush1.xpose.msra.mxu0 0.0
    %148 = vmatprep.subr.mxu0 0.0
    %149 = vmatpush1.xpose.msra.mxu0 0.0
    %150 = vmatprep.subr.mxu0 0.0
    %151 = vmatpush1.xpose.msra.mxu0 0.0
    %152 = vmatprep.subr.mxu0 0.0
    %153 = vmatpush1.xpose.msra.mxu0 0.0
    %154 = vmatprep.subr.mxu0 0.0
    %155 = vmatpush1.xpose.msra.mxu0 0.0
    %156 = vmatprep.subr.mxu0 0.0
    %157 = vmatpush1.xpose.msra.mxu0 0.0
    %158 = vmatprep.subr.mxu0 0.0
    %159 = vmatpush1.xpose.msra.mxu0 0.0
    %160 = vmatprep.subr.mxu0 0.0
    %161 = vmatpush1.xpose.msra.mxu0 0.0
    %162 = vmatprep.subr.mxu0 0.0
    %163 = vmatpush1.xpose.msra.mxu0 0.0
    %164 = vmatprep.subr.mxu0 0.0
    %165 = vmatpush1.xpose.msra.mxu0 0.0
    %166 = vmatprep.subr.mxu0 0.0
    %167 = vmatpush1.xpose.msra.mxu0 0.0
    %168 = vmatprep.subr.mxu0 0.0
    %169 = vmatpush1.xpose.msra.mxu0 0.0
    %170 = vmatprep.subr.mxu0 0.0
    %171 = vmatpush1.xpose.msra.mxu0 0.0
    %172 = vmatprep.subr.mxu0 0.0
    %173 = vmatpush1.xpose.msra.mxu0 0.0
    %174 = vmatprep.subr.mxu0 0.0
    %175 = vmatpush1.xpose.msra.mxu0 0.0
    %176 = vmatprep.subr.mxu0 0.0
    %177 = vmatpush1.xpose.msra.mxu0 %v144
    %178 = vmatprep.subr.mxu0 0.0
    %179 = vmatpush2.xpose.msra.mxu0 0.0
    %180 = vmatprep.subr.mxu0 0.0
    %181 = vmatpush2.xpose.msra.mxu0 0.0
    %182 = vmatprep.subr.mxu0 0.0
    %183 = vmatpush2.xpose.msra.mxu0 0.0
    %184 = vmatprep.subr.mxu0 0.0
    %185 = vmatpush2.xpose.msra.mxu0 0.0
    %186 = vmatprep.subr.mxu0 0.0
    %187 = vmatpush2.xpose.msra.mxu0 0.0
    %188 = vmatprep.subr.mxu0 0.0
    %189 = vmatpush2.xpose.msra.mxu0 0.0
    %190 = vmatprep.subr.mxu0 0.0
    %191 = vmatpush2.xpose.msra.mxu0 0.0
    %192 = vmatprep.subr.mxu0 0.0
    %193 = vmatpush2.xpose.msra.mxu0 0.0
    %194 = vmatprep.subr.mxu0 0.0
    %195 = vmatpush2.xpose.msra.mxu0 0.0
    %196 = vmatprep.subr.mxu0 0.0
    %197 = vmatpush2.xpose.msra.mxu0 0.0
    %198 = vmatprep.subr.mxu0 0.0
    %199 = vmatpush2.xpose.msra.mxu0 0.0
    %200 = vmatprep.subr.mxu0 0.0
    %201 = vmatpush2.xpose.msra.mxu0 0.0
    %202 = vmatprep.subr.mxu0 0.0
    %203 = vmatpush2.xpose.msra.mxu0 0.0
    %204 = vmatprep.subr.mxu0 0.0
    %205 = vmatpush2.xpose.msra.mxu0 0.0
    %206 = vmatprep.subr.mxu0 0.0
    %207 = vmatpush2.xpose.msra.mxu0 0.0
    %208 = vmatprep.subr.mxu0 0.0
    %209 = vmatpush2.xpose.msra.mxu0 0.0
    %210 = vmatprep.mubr.f32.mxu0 0.0
    %211 = vmatmul.mubr.f32.gmra.mxu0 %v141
    %v212 = vpop.f32.mrf.mxu0
    %v213 = vadd.f32 0.0, %v212
    %v214 = vpop.f32.mrf.mxu0
    %215 = vdwg.mxu0
    %v216 = vlaneseq
    %v217 = vshrl.u32 %v216, 7
    %v218 = vsub.s32 0, %v217
    %v219 = vrot.slane %v213, %v218
    %v220 = vadd.f32 %v138, %v219
    %v221 = vmul.f32 %v132, 2.0
    %v222 = vsub.f32 %v220, %v221
    %v223 = vmax.f32 %v222, 0.0
    %v224 = vrsqrt.pop %v223
    %v225 = vmul.f32 %v223, %v224
    %vm226 = vcmp.eq.f32.partialorder %v223, inf
    %v227 = vsel %vm226, %v223, %v225
    %vm228 = vcmp.eq.f32.partialorder %v223, 0.0
    %v229 = vand.u32 %v223, 2147483648
    %v230 = vsel %vm228, %v229, %v227
    %v231 = vsub.f32 0.0, %v230
    %v232 = vmul.f32 %v231, 0.5
    %v233 = vmul.f32 %v232, 1.442695
    %v234 = vpow.pop %v233
    %s235 = smul.u32 %s48, 8
    %v236 = vlaneseq
    %v237 = vshrl.u32 %v236, 7
    %v238 = vstv %s235
    %v239 = vadd.s32 %v238, %v237
    %s240 = smul.u32 %s49, 8
    %v241 = vlaneseq
    %v242 = vand.u32 %v241, 127
    %v243 = vstv %s240
    %v244 = vadd.s32 %v243, %v242
    %vm245 = vcmp.lt.s32.totalorder %v239, 8
    %vm246 = vcmp.lt.s32.totalorder %v244, 8
    %vm247 = vmand %vm245, %vm246
    %vm248 = vcmp.ne.s32.totalorder %v239, %v244
    %vm249 = vmand %vm247, %vm248
    %p250 = scmp.eq.s32.totalorder %s48, %s49
    %s251 = scalar_select %p250, 1.0, 2.0
    %v252 = vld [vmem:[#allocation2] sm:$0xff]
    %v253 = vsel %vm249, %v234, 0.0
    %v254 = vstv %s251
    %v255 = vmul.f32 %v253, %v254
    %v256 = vadd.f32 %v252, %v255
    %vm257 = vcmask 64512
    %258 = vst.msk [vmem:[#allocation2] sm:$0xff] %vm257, %v256
    // Predicated region
    $region22: #{tpu_custom_call.1} parent=1 // pred_check
      %p259 = pneg %p50
    $region23: #{tpu_custom_call.1} parent=1 // pred_check_branch
      %261 = sbr.rel (%p259) target = $region25
    $region24: #{tpu_custom_call.1} parent=1 // pred_region
      %v262 = vld [vmem:[#allocation2] sm:$0xff]
      %v263 = vsel %vm257, %v262, 0.0
      %264 = vadd.xlane.f32.xlu0 %v263
      %v265 = vpop.xlane.xlu0 %264
      %v266 = vrot.slane %v265, 4
      %v267 = vadd.f32 %v265, %v266
      %v268 = vrot.slane %v267, 2
      %v269 = vadd.f32 %v267, %v268
      %v270 = vrot.slane %v269, 1
      %v271 = vadd.f32 %v269, %v270
      %s272 = vtos %v271
      %s273 = smul.f32 %s272, 0.017857144
      %v274 = vstv %s273
      %vm275 = vcmask 0
      %276 = vst.msk [vmem:[#allocation11] sm:$0x1] %vm275, %v274
    $region25: #{tpu_custom_call.1} parent=1 // pred_fallthru
      _
    // Predicated region
    $region26: #{tpu_custom_call.1} parent=1 // pred_check
      _
    $region27: #{tpu_custom_call.1} parent=1 // pred_check_branch
      %278 = sbr.rel (0) target = $region29
    $region28: #{tpu_custom_call.1} parent=1 // pred_region
      %s280 = ssub.s32 16, 16
      %281 = vsyncadd [#allocation8], %s280
      %s283 = sshll.u32 [#allocation11], 4
      %s284 = int_to_ptr.vmem [resolvable:$true] %s283
      %286 = dma.vmem_to_hbm [thread:$0]  %s284, 16, %s4, [#allocation8]
    $region29: #{tpu_custom_call.1} parent=1 // pred_fallthru
      _
    // Predicated region
    $region30: #{tpu_custom_call.1} parent=1 // pred_check
      _
    $region31: #{tpu_custom_call.1} parent=1 // pred_check_branch
      %288 = sbr.rel (0) target = $region33
    $region32: #{tpu_custom_call.1} parent=1 // pred_region
      %289 = dma.done [#allocation8], 16
    $region33: #{tpu_custom_call.1} parent=1 // pred_fallthru
      _
    %290 = vsyncpa [#allocation7], 1
    %291 = vsyncpa [#allocation10], 1
    %292 = vsyncpa [#allocation8], 1

</llo_original>
